<compile_context>
chip_gen: v5e
topology: v5e:2x2
jax: 0.10.0
libtpu: 0.0.40
codegen_flags: <defaults>
</compile_context>

<pallas_src>
import functools

import jax
import jax.numpy as jnp
import numpy as np
from jax.experimental import pallas as pl
from jax.experimental.pallas import tpu as pltpu


def _hinge_mc_v2_kernel(outputs_ref, labels_ref, out_ref,
                        bin_acc, cls_acc, cnt_acc,
                        *, margin, interclass_loss, batch_size, tile_b):
    pid = pl.program_id(0)

    @pl.when(pid == 0)
    def _init():
        bin_acc[...] = jnp.zeros_like(bin_acc)
        cls_acc[...] = jnp.zeros_like(cls_acc)
        cnt_acc[...] = jnp.zeros_like(cnt_acc)

    x = outputs_ref[...].astype(jnp.float32)          # (TB, C), upcast in-kernel
    lab = labels_ref[...]                             # (TB, 1) i32
    TB, C = x.shape
    margin_f = jnp.float32(margin)

    # Row-validity mask for the (possibly partial) last tile.
    row = jax.lax.broadcasted_iota(jnp.int32, (TB, 1), 0) + pid * tile_b
    valid = row < batch_size                          # (TB, 1) bool
    x = jnp.where(valid, x, 0.0)                      # keep padded-row garbage finite

    cls = jax.lax.broadcasted_iota(jnp.int32, (TB, C), 1)
    mask = (lab == cls) & valid                       # one-hot true class; all-false on pad

    # Binary (one-vs-all) hinge: relu(margin - x) at true class, relu(margin + x) else.
    # (avoids materializing a +/-1 sign tensor and an extra multiply)
    bin_hinge = jnp.maximum(jnp.where(mask, margin_f - x, margin_f + x), 0.0)
    bin_hinge = jnp.where(valid, bin_hinge, 0.0)
    bin_acc[...] += jnp.sum(bin_hinge, axis=0, keepdims=True)               # (1, C)

    if interclass_loss:
        maskf = mask.astype(jnp.float32)
        own = jnp.sum(x * maskf, axis=1, keepdims=True)                     # (TB, 1)
        pair = jnp.maximum(margin_f - (own - x), 0.0)
        pair = jnp.where(mask, 0.0, pair)                                   # drop true-class column
        pair = jnp.where(valid, pair, 0.0)                                  # drop padded rows
        row_sum = jnp.sum(pair, axis=1, keepdims=True)                      # (TB, 1)
        cls_acc[...] += jnp.sum(maskf * row_sum, axis=0, keepdims=True)     # (1, C)
        cnt_acc[...] += jnp.sum(maskf, axis=0, keepdims=True)               # (1, C)

    @pl.when(pid == pl.num_programs(0) - 1)
    def _finalize():
        total = jnp.sum(bin_acc[...]) / jnp.float32(batch_size * C)
        if interclass_loss:
            count = cnt_acc[...]
            denom = jnp.maximum(count * jnp.float32(C - 1), 1.0)
            intcls = jnp.where(count > 0, cls_acc[...] / denom, 0.0)
            total = total + jnp.sum(intcls) / jnp.float32(C)
        out_ref[0, 0] = total


def hinge_mc_v2(outputs, labels, *, margin=1.0, interclass_loss=True, tile_b=512):
    """outputs: (B, C) float32/bfloat16, labels: (B,) int -> scalar float32 loss.

    Note: labels are assumed to lie in [0, C); out-of-range labels would silently
    contribute with 'own score' 0 (the PyTorch reference would instead error).
    """
    B, C = outputs.shape
    labels2d = labels.astype(jnp.int32).reshape(B, 1)

    # Tile the batch dim, keep full C per block.  Small batches use a single
    # full-extent block (always a legal block shape); larger batches stream
    # sublane-aligned tiles with a masked partial last block.  tile_b=512 keeps
    # double-buffered input tiles well inside v7x's 32 MiB scoped VMEM default.
    tb = B if B <= tile_b else tile_b
    grid = (pl.cdiv(B, tb),)

    kernel = functools.partial(
        _hinge_mc_v2_kernel,
        margin=float(margin),
        interclass_loss=bool(interclass_loss),
        batch_size=B,
        tile_b=tb,
    )

    itemsize = jnp.dtype(outputs.dtype).itemsize
    cost = pl.CostEstimate(
        flops=10 * B * C,
        transcendentals=0,
        bytes_accessed=B * C * itemsize + B * 4 + 4,
    )

    out = pl.pallas_call(
        kernel,
        out_shape=jax.ShapeDtypeStruct((1, 1), jnp.float32),
        grid_spec=pltpu.PrefetchScalarGridSpec(
            num_scalar_prefetch=0,
            grid=grid,
            in_specs=[
                pl.BlockSpec((tb, C), lambda i: (i, 0)),
                pl.BlockSpec((tb, 1), lambda i: (i, 0)),
            ],
            out_specs=pl.BlockSpec(memory_space=pltpu.MemorySpace.SMEM),
            scratch_shapes=[
                pltpu.VMEM((1, C), jnp.float32),   # bin_acc
                pltpu.VMEM((1, C), jnp.float32),   # cls_acc
                pltpu.VMEM((1, C), jnp.float32),   # cnt_acc
            ],
        ),
        compiler_params=pltpu.CompilerParams(
            dimension_semantics=("arbitrary",),    # resident accumulators across B tiles
        ),
        cost_estimate=cost,
    )(outputs, labels2d)
    return out[0, 0]


def _reference_numpy(outputs, labels, margin, interclass_loss=True):
    outputs = np.asarray(outputs, dtype=np.float64)
    labels = np.asarray(labels)
    B, C = outputs.shape
    mask = labels[:, None] == np.arange(C)[None, :]
    concat_labels = np.where(mask, 1.0, -1.0)
    bin_loss = np.clip(margin - outputs.T * concat_labels.T, 0.0, None)
    intcls = np.zeros(C)
    if interclass_loss:
        for i in range(C):
            sel = outputs[labels == i]
            if sel.shape[0] != 0:
                m = np.arange(C) != i
                intcls[i] = np.mean(
                    np.clip(margin - (sel[:, i:i + 1] - sel[:, m]), 0.0, None)
                )
    return bin_loss.mean() + intcls.mean()


if __name__ == "__main__":
    key = jax.random.PRNGKey(0)
    k1, k2, k3, k4 = jax.random.split(key, 4)
    margin = 1.0

    # Small case matching the module's expected shapes: (batch, num_classes).
    B, C = 8, 4
    outputs = jax.random.normal(k1, (B, C), dtype=jnp.float32)
    labels = jax.random.randint(k2, (B,), 0, C, dtype=jnp.int32)

    loss = jax.block_until_ready(hinge_mc_v2(outputs, labels, margin=margin))
    ref = _reference_numpy(np.asarray(outputs), np.asarray(labels), margin, True)
    assert np.allclose(float(loss), ref, rtol=1e-5, atol=1e-5), (float(loss), ref)

    # Larger, gridded case (multiple tiles + masked partial last tile).
    B2, C2 = 1037, 16
    out2 = jax.random.normal(k3, (B2, C2), dtype=jnp.float32)
    lab2 = jax.random.randint(k4, (B2,), 0, C2, dtype=jnp.int32)

    loss2 = jax.block_until_ready(hinge_mc_v2(out2, lab2, margin=margin, tile_b=256))
    ref2 = _reference_numpy(np.asarray(out2), np.asarray(lab2), margin, True)
    assert np.allclose(float(loss2), ref2, rtol=1e-4, atol=1e-4), (float(loss2), ref2)

    # Native-bf16 streaming path (no f32 cast in the wrapper; upcast in-kernel).
    out2_bf16 = out2.astype(jnp.bfloat16)
    loss3 = jax.block_until_ready(hinge_mc_v2(out2_bf16, lab2, margin=margin, tile_b=256))
    ref3 = _reference_numpy(
        np.asarray(out2_bf16.astype(jnp.float32)), np.asarray(lab2), margin, True)
    assert np.allclose(float(loss3), ref3, rtol=1e-3, atol=1e-3), (float(loss3), ref3)

    print("KERNEL_OK")
</pallas_src>

<mosaic_0001>
module attributes {stable_mosaic.version = 11 : i64} {
  func.func @_hinge_mc_v2_kernel(%arg0: i32, %arg1: memref<8x4xf32, #tpu.memory_space<vmem>>, %arg2: memref<8x1xi32, #tpu.memory_space<vmem>>, %arg3: memref<1x1xf32, #tpu.memory_space<smem>>, %arg4: memref<1x4xf32, #tpu.memory_space<vmem>>, %arg5: memref<1x4xf32, #tpu.memory_space<vmem>>, %arg6: memref<1x4xf32, #tpu.memory_space<vmem>>) attributes {dimension_semantics = [#tpu.dimension_semantics<arbitrary>], iteration_bounds = array<i64: 1>, scalar_prefetch = 0 : i64, scratch_operands = 3 : i64, tpu.core_type = #tpu.core_type<tc>, window_params = [{transform_indices = @transform_0, window_bounds = array<i64: 8, 4>}, {transform_indices = @transform_1, window_bounds = array<i64: 8, 1>}, {transform_indices = @transform_2, window_bounds = array<i64: 1, 1>}]} {
    %c0_i32 = arith.constant 0 : i32
    %0 = arith.cmpi eq, %arg0, %c0_i32 : i32
    %1 = arith.extui %0 : i1 to i32
    %c0_i32_0 = arith.constant 0 : i32
    %2 = arith.cmpi ne, %1, %c0_i32_0 : i32
    scf.if %2 {
      %cst_32 = arith.constant 0.000000e+00 : f32
      %70 = vector.broadcast %cst_32 : f32 to vector<1x4xf32>
      %c0_33 = arith.constant 0 : index
      %c0_34 = arith.constant 0 : index
      %71 = vector.load %arg4[%c0_33, %c0_34] : memref<1x4xf32, #tpu.memory_space<vmem>>, vector<1x4xf32>
      tpu.vector_store %arg4[%c0_33, %c0_34], %70 {strides = array<i32>} : memref<1x4xf32, #tpu.memory_space<vmem>>, vector<1x4xf32>,
      %cst_35 = arith.constant 0.000000e+00 : f32
      %72 = vector.broadcast %cst_35 : f32 to vector<1x4xf32>
      %c0_36 = arith.constant 0 : index
      %c0_37 = arith.constant 0 : index
      %73 = vector.load %arg5[%c0_36, %c0_37] : memref<1x4xf32, #tpu.memory_space<vmem>>, vector<1x4xf32>
      tpu.vector_store %arg5[%c0_36, %c0_37], %72 {strides = array<i32>} : memref<1x4xf32, #tpu.memory_space<vmem>>, vector<1x4xf32>,
      %cst_38 = arith.constant 0.000000e+00 : f32
      %74 = vector.broadcast %cst_38 : f32 to vector<1x4xf32>
      %c0_39 = arith.constant 0 : index
      %c0_40 = arith.constant 0 : index
      %75 = vector.load %arg6[%c0_39, %c0_40] : memref<1x4xf32, #tpu.memory_space<vmem>>, vector<1x4xf32>
      tpu.vector_store %arg6[%c0_39, %c0_40], %74 {strides = array<i32>} : memref<1x4xf32, #tpu.memory_space<vmem>>, vector<1x4xf32>,
    } else {
    }
    %c0 = arith.constant 0 : index
    %c0_1 = arith.constant 0 : index
    %3 = vector.load %arg1[%c0, %c0_1] : memref<8x4xf32, #tpu.memory_space<vmem>>, vector<8x4xf32>
    %c0_2 = arith.constant 0 : index
    %c0_3 = arith.constant 0 : index
    %4 = vector.load %arg2[%c0_2, %c0_3] : memref<8x1xi32, #tpu.memory_space<vmem>>, vector<8x1xi32>
    %5 = tpu.iota {dimensions = array<i32: 0>} : vector<8x1xi32>
    %c8_i32 = arith.constant 8 : i32
    %6 = arith.muli %arg0, %c8_i32 : i32
    %7 = vector.broadcast %6 : i32 to vector<8x1xi32>
    %8 = arith.addi %5, %7 : vector<8x1xi32>
    %c8_i32_4 = arith.constant 8 : i32
    %9 = vector.broadcast %c8_i32_4 : i32 to vector<8x1xi32>
    %10 = arith.cmpi slt, %8, %9 : vector<8x1xi32>
    %cst = arith.constant 0.000000e+00 : f32
    %11 = vector.shape_cast %10 : vector<8x1xi1> to vector<8x1xi1>
    %12 = vector.broadcast %11 : vector<8x1xi1> to vector<8x4xi1>
    %13 = vector.broadcast %cst : f32 to vector<8x4xf32>
    %14 = arith.select %12, %3, %13 : vector<8x4xi1>, vector<8x4xf32>
    %15 = tpu.iota {dimensions = array<i32: 1>} : vector<8x4xi32>
    %16 = vector.broadcast %4 : vector<8x1xi32> to vector<8x4xi32>
    %17 = arith.cmpi eq, %16, %15 : vector<8x4xi32>
    %18 = vector.broadcast %10 : vector<8x1xi1> to vector<8x4xi1>
    %19 = arith.andi %17, %18 : vector<8x4xi1>
    %cst_5 = arith.constant 1.000000e+00 : f32
    %20 = vector.broadcast %cst_5 : f32 to vector<8x4xf32>
    %21 = arith.subf %20, %14 : vector<8x4xf32>
    %cst_6 = arith.constant 1.000000e+00 : f32
    %22 = vector.broadcast %cst_6 : f32 to vector<8x4xf32>
    %23 = arith.addf %22, %14 : vector<8x4xf32>
    %24 = arith.select %19, %21, %23 : vector<8x4xi1>, vector<8x4xf32>
    %cst_7 = arith.constant 0.000000e+00 : f32
    %25 = vector.broadcast %cst_7 : f32 to vector<8x4xf32>
    %26 = arith.maximumf %24, %25 : vector<8x4xf32>
    %cst_8 = arith.constant 0.000000e+00 : f32
    %27 = vector.shape_cast %10 : vector<8x1xi1> to vector<8x1xi1>
    %28 = vector.broadcast %27 : vector<8x1xi1> to vector<8x4xi1>
    %29 = vector.broadcast %cst_8 : f32 to vector<8x4xf32>
    %30 = arith.select %28, %26, %29 : vector<8x4xi1>, vector<8x4xf32>
    %c0_9 = arith.constant 0 : index
    %c0_10 = arith.constant 0 : index
    %31 = vector.load %arg4[%c0_9, %c0_10] : memref<1x4xf32, #tpu.memory_space<vmem>>, vector<1x4xf32>
    %cst_11 = arith.constant dense<0.000000e+00> : vector<4xf32>
    %32 = vector.multi_reduction <add>, %30, %cst_11 [0] : vector<8x4xf32> to vector<4xf32>
    %33 = vector.shape_cast %32 : vector<4xf32> to vector<1x4xf32>
    %34 = arith.addf %31, %33 : vector<1x4xf32>
    %c0_12 = arith.constant 0 : index
    %c0_13 = arith.constant 0 : index
    %35 = vector.load %arg4[%c0_12, %c0_13] : memref<1x4xf32, #tpu.memory_space<vmem>>, vector<1x4xf32>
    tpu.vector_store %arg4[%c0_12, %c0_13], %34 {strides = array<i32>} : memref<1x4xf32, #tpu.memory_space<vmem>>, vector<1x4xf32>,
    %36 = arith.extui %19 : vector<8x4xi1> to vector<8x4xi32>
    %37 = arith.sitofp %36 : vector<8x4xi32> to vector<8x4xf32>
    %38 = arith.mulf %14, %37 : vector<8x4xf32>
    %cst_14 = arith.constant dense<0.000000e+00> : vector<8xf32>
    %39 = vector.multi_reduction <add>, %38, %cst_14 [1] : vector<8x4xf32> to vector<8xf32>
    %40 = vector.shape_cast %39 : vector<8xf32> to vector<8x1xf32>
    %41 = vector.broadcast %40 : vector<8x1xf32> to vector<8x4xf32>
    %42 = arith.subf %41, %14 : vector<8x4xf32>
    %cst_15 = arith.constant 1.000000e+00 : f32
    %43 = vector.broadcast %cst_15 : f32 to vector<8x4xf32>
    %44 = arith.subf %43, %42 : vector<8x4xf32>
    %cst_16 = arith.constant 0.000000e+00 : f32
    %45 = vector.broadcast %cst_16 : f32 to vector<8x4xf32>
    %46 = arith.maximumf %44, %45 : vector<8x4xf32>
    %cst_17 = arith.constant 0.000000e+00 : f32
    %47 = vector.broadcast %cst_17 : f32 to vector<8x4xf32>
    %48 = arith.select %19, %47, %46 : vector<8x4xi1>, vector<8x4xf32>
    %cst_18 = arith.constant 0.000000e+00 : f32
    %49 = vector.shape_cast %10 : vector<8x1xi1> to vector<8x1xi1>
    %50 = vector.broadcast %49 : vector<8x1xi1> to vector<8x4xi1>
    %51 = vector.broadcast %cst_18 : f32 to vector<8x4xf32>
    %52 = arith.select %50, %48, %51 : vector<8x4xi1>, vector<8x4xf32>
    %cst_19 = arith.constant dense<0.000000e+00> : vector<8xf32>
    %53 = vector.multi_reduction <add>, %52, %cst_19 [1] : vector<8x4xf32> to vector<8xf32>
    %54 = vector.shape_cast %53 : vector<8xf32> to vector<8x1xf32>
    %c0_20 = arith.constant 0 : index
    %c0_21 = arith.constant 0 : index
    %55 = vector.load %arg5[%c0_20, %c0_21] : memref<1x4xf32, #tpu.memory_space<vmem>>, vector<1x4xf32>
    %56 = vector.broadcast %54 : vector<8x1xf32> to vector<8x4xf32>
    %57 = arith.mulf %37, %56 : vector<8x4xf32>
    %cst_22 = arith.constant dense<0.000000e+00> : vector<4xf32>
    %58 = vector.multi_reduction <add>, %57, %cst_22 [0] : vector<8x4xf32> to vector<4xf32>
    %59 = vector.shape_cast %58 : vector<4xf32> to vector<1x4xf32>
    %60 = arith.addf %55, %59 : vector<1x4xf32>
    %c0_23 = arith.constant 0 : index
    %c0_24 = arith.constant 0 : index
    %61 = vector.load %arg5[%c0_23, %c0_24] : memref<1x4xf32, #tpu.memory_space<vmem>>, vector<1x4xf32>
    tpu.vector_store %arg5[%c0_23, %c0_24], %60 {strides = array<i32>} : memref<1x4xf32, #tpu.memory_space<vmem>>, vector<1x4xf32>,
    %c0_25 = arith.constant 0 : index
    %c0_26 = arith.constant 0 : index
    %62 = vector.load %arg6[%c0_25, %c0_26] : memref<1x4xf32, #tpu.memory_space<vmem>>, vector<1x4xf32>
    %cst_27 = arith.constant dense<0.000000e+00> : vector<4xf32>
    %63 = vector.multi_reduction <add>, %37, %cst_27 [0] : vector<8x4xf32> to vector<4xf32>
    %64 = vector.shape_cast %63 : vector<4xf32> to vector<1x4xf32>
    %65 = arith.addf %62, %64 : vector<1x4xf32>
    %c0_28 = arith.constant 0 : index
    %c0_29 = arith.constant 0 : index
    %66 = vector.load %arg6[%c0_28, %c0_29] : memref<1x4xf32, #tpu.memory_space<vmem>>, vector<1x4xf32>
    tpu.vector_store %arg6[%c0_28, %c0_29], %65 {strides = array<i32>} : memref<1x4xf32, #tpu.memory_space<vmem>>, vector<1x4xf32>,
    %c0_i32_30 = arith.constant 0 : i32
    %67 = arith.cmpi eq, %arg0, %c0_i32_30 : i32
    %68 = arith.extui %67 : i1 to i32
    %c0_i32_31 = arith.constant 0 : i32
    %69 = arith.cmpi ne, %68, %c0_i32_31 : i32
    scf.if %69 {
      %c0_32 = arith.constant 0 : index
      %c0_33 = arith.constant 0 : index
      %70 = vector.load %arg4[%c0_32, %c0_33] : memref<1x4xf32, #tpu.memory_space<vmem>>, vector<1x4xf32>
      %71 = vector.shape_cast %70 : vector<1x4xf32> to vector<1x1x4xf32>
      %cst_34 = arith.constant dense<0.000000e+00> : vector<1xf32>
      %72 = vector.multi_reduction <add>, %71, %cst_34 [1, 2] : vector<1x1x4xf32> to vector<1xf32>
      %73 = vector.shape_cast %72 : vector<1xf32> to vector<1x1x1xf32>
      %74 = vector.extract %73[0, 0, 0] : f32 from vector<1x1x1xf32>
      %cst_35 = arith.constant 3.200000e+01 : f32
      %75 = arith.divf %74, %cst_35 : f32
      %c0_36 = arith.constant 0 : index
      %c0_37 = arith.constant 0 : index
      %76 = vector.load %arg6[%c0_36, %c0_37] : memref<1x4xf32, #tpu.memory_space<vmem>>, vector<1x4xf32>
      %cst_38 = arith.constant 3.000000e+00 : f32
      %77 = vector.broadcast %cst_38 : f32 to vector<1x4xf32>
      %78 = arith.mulf %76, %77 : vector<1x4xf32>
      %cst_39 = arith.constant 1.000000e+00 : f32
      %79 = vector.broadcast %cst_39 : f32 to vector<1x4xf32>
      %80 = arith.maximumf %78, %79 : vector<1x4xf32>
      %cst_40 = arith.constant 0.000000e+00 : f32
      %81 = vector.broadcast %cst_40 : f32 to vector<1x4xf32>
      %82 = arith.cmpf ogt, %76, %81 : vector<1x4xf32>
      %c0_41 = arith.constant 0 : index
      %c0_42 = arith.constant 0 : index
      %83 = vector.load %arg5[%c0_41, %c0_42] : memref<1x4xf32, #tpu.memory_space<vmem>>, vector<1x4xf32>
      %84 = arith.divf %83, %80 : vector<1x4xf32>
      %cst_43 = arith.constant 0.000000e+00 : f32
      %85 = vector.broadcast %cst_43 : f32 to vector<1x4xf32>
      %86 = arith.select %82, %84, %85 : vector<1x4xi1>, vector<1x4xf32>
      %87 = vector.shape_cast %86 : vector<1x4xf32> to vector<1x1x4xf32>
      %cst_44 = arith.constant dense<0.000000e+00> : vector<1xf32>
      %88 = vector.multi_reduction <add>, %87, %cst_44 [1, 2] : vector<1x1x4xf32> to vector<1xf32>
      %89 = vector.shape_cast %88 : vector<1xf32> to vector<1x1x1xf32>
      %90 = vector.extract %89[0, 0, 0] : f32 from vector<1x1x1xf32>
      %cst_45 = arith.constant 4.000000e+00 : f32
      %91 = arith.divf %90, %cst_45 : f32
      %92 = arith.addf %75, %91 : f32
      %c0_46 = arith.constant 0 : index
      %c0_47 = arith.constant 0 : index
      %93 = memref.load %arg3[%c0_46, %c0_47] : memref<1x1xf32, #tpu.memory_space<smem>>
      memref.store %92, %arg3[%c0_46, %c0_47] : memref<1x1xf32, #tpu.memory_space<smem>>
    } else {
    }
    return
  }
  func.func @transform_0(%arg0: i32) -> (i32, i32) {
    %c0_i32 = arith.constant 0 : i32
    %c0_i32_0 = arith.constant 0 : i32
    return %arg0, %c0_i32 : i32, i32
  }
  func.func @transform_1(%arg0: i32) -> (i32, i32) {
    %c0_i32 = arith.constant 0 : i32
    %c0_i32_0 = arith.constant 0 : i32
    return %arg0, %c0_i32 : i32, i32
  }
  func.func @transform_2(%arg0: i32) -> (i32, i32) {
    %c0_i32 = arith.constant 0 : i32
    %c0_i32_0 = arith.constant 0 : i32
    %c0_i32_1 = arith.constant 0 : i32
    return %c0_i32, %c0_i32_0 : i32, i32
  }
}

</mosaic_0001>

<llo_original>
// kernel: tpu_custom_call.1
$region0: #{tpu_custom_call.1}
  #allocation0 [shape = 'u32[]', space=smem, size = 0x4, offset = 0x4, fixed_abs, tag = 'smem constant byte address 0x4 - core index']
  #allocation1 [shape = 'u32[72,128]{1,0:T(1,128)}', space=vmem, size = 0x9000, scoped, tag = 'internal scratch']
  #allocation2 [shape = 'f32[1,4]{1,0:T(1,128)}', space=vmem, size = 0x200, scoped, tag = 'scratch operand']
  #allocation3 [shape = 'f32[1,4]{1,0:T(1,128)}', space=vmem, size = 0x200, scoped, tag = 'scratch operand']
  #allocation4 [shape = 'f32[1,4]{1,0:T(1,128)}', space=vmem, size = 0x200, scoped, tag = 'scratch operand']
  %s0 = inlined_call_operand.vmem [shape: f32[8,4], index: 0, kind: input, shape index: {}]
  %s1 = inlined_call_operand.vmem [shape: s32[8,1], index: 1, kind: input, shape index: {}]
  %s2 = inlined_call_operand.hbm [shape: f32[1,1], index: 2, kind: output, shape index: {}]
  %s3 = sld [smem:[#allocation0]]
  $region26: #{tpu_custom_call.1} parent=0
    _
  %s5 = ssub.s32 1, %s3
  %s6 = scalar_select 0, %s5, %s3
  $region1: #{tpu_custom_call.1} parent=0
    #allocation5 [shape = 'u8[512]{0}', space=smem, size = 0x200, scoped, tag = 'output window, operand 0, single buffered']
    #allocation6 [shape = 's32[1]{0}', space=sflag, size = 0x4, scoped, tag = 'scoped memory for tpu_custom_call.1']
    %7 = vsyncpa [#allocation6], 0
    // Predicated region
    $region2: #{tpu_custom_call.1} parent=1 // pred_check
      _
    $region3: #{tpu_custom_call.1} parent=1 // pred_check_branch
      %9 = sbr.rel (0) target = $region5
    $region4: #{tpu_custom_call.1} parent=1 // pred_region
      _
    $region5: #{tpu_custom_call.1} parent=1 // pred_fallthru
      _
    // Predicated region
    $region6: #{tpu_custom_call.1} parent=1 // pred_check
      _
    $region7: #{tpu_custom_call.1} parent=1 // pred_check_branch
      %11 = sbr.rel (0) target = $region9
    $region8: #{tpu_custom_call.1} parent=1 // pred_region
      _
    $region9: #{tpu_custom_call.1} parent=1 // pred_fallthru
      _
    %p12 = scmp.eq.s32.totalorder 0, 0
    // Predicated region
    $region10: #{tpu_custom_call.1} parent=1 // pred_check
      %p13 = pneg %p12
    $region11: #{tpu_custom_call.1} parent=1 // pred_check_branch
      %15 = sbr.rel (%p13) target = $region13
    $region12: #{tpu_custom_call.1} parent=1 // pred_region
      %vm16 = vcmask 24576
      %17 = vst.msk [vmem:[#allocation2] sm:$0x1] %vm16, 0.0
      %18 = vst.msk [vmem:[#allocation3] sm:$0x1] %vm16, 0.0
      %19 = vst.msk [vmem:[#allocation4] sm:$0x1] %vm16, 0.0
    $region13: #{tpu_custom_call.1} parent=1 // pred_fallthru
      _
    %v20 = vld [vmem:[%s0] sm:$0xff]
    %v21 = vld [vmem:[%s1] sm:$0xff]
    %v22 = vlaneseq
    %v23 = vshrl.u32 %v22, 7
    %s24 = smul.u32 0, 8
    %v25 = vstv %s24
    %v26 = vadd.s32 %v23, %v25
    %vm27 = vcmp.lt.s32.totalorder %v26, 8
    %v28 = vsel %vm27, 1, 0
    %vm29 = vcmp.eq.s32.totalorder %v28, 1
    %v30 = vsel %vm29, %v20, 0.0
    %v31 = vlaneseq
    %v32 = vand.u32 %v31, 127
    %33 = vset.pattern.permute.xlu0 0
    %34 = vperm.xlu0 %33, %v21
    %v35 = vpop.permute.xlu0 %34
    %vm36 = vcmp.eq.s32.totalorder %v35, %v32
    %vm37 = vmand %vm36, %vm29
    %v38 = vsub.f32 1.0, %v30
    %v39 = vadd.f32 %v30, 1.0
    %v40 = vsel %vm37, %v38, %v39
    %v41 = vmax.f32 %v40, 0.0
    %v42 = vsel %vm29, %v41, 0.0
    %v43 = vld [vmem:[#allocation2] sm:$0x1]
    %vm44 = vcmask 31744
    %v45 = vsel %vm44, %v42, 0.0
    %v46 = vrot.slane %v45, 4
    %v47 = vadd.f32 %v45, %v46
    %v48 = vrot.slane %v47, 2
    %v49 = vadd.f32 %v47, %v48
    %v50 = vrot.slane %v49, 1
    %v51 = vadd.f32 %v49, %v50
    %v52 = vadd.f32 %v43, %v51
    %vm53 = vcmask 24576
    %54 = vst.msk [vmem:[#allocation2] sm:$0x1] %vm53, %v52
    %v55 = vsel %vm37, 1, 0
    %v56 = vcvt.s32.f32 %v55
    %v57 = vmul.f32 %v30, %v56
    %v58 = vsel %vm44, %v57, 0.0
    %59 = vadd.xlane.f32.xlu0 %v58
    %v60 = vpop.xlane.xlu0 %59
    %v61 = vsub.f32 %v60, %v30
    %v62 = vsub.f32 1.0, %v61
    %v63 = vmax.f32 %v62, 0.0
    %v64 = vsel %vm37, 0.0, %v63
    %v65 = vsel %vm29, %v64, 0.0
    %v66 = vsel %vm44, %v65, 0.0
    %67 = vadd.xlane.f32.xlu0 %v66
    %v68 = vpop.xlane.xlu0 %67
    %v69 = vld [vmem:[#allocation3] sm:$0x1]
    %v70 = vmul.f32 %v56, %v68
    %v71 = vsel %vm44, %v70, 0.0
    %v72 = vrot.slane %v71, 4
    %v73 = vadd.f32 %v71, %v72
    %v74 = vrot.slane %v73, 2
    %v75 = vadd.f32 %v73, %v74
    %v76 = vrot.slane %v75, 1
    %v77 = vadd.f32 %v75, %v76
    %v78 = vadd.f32 %v69, %v77
    %79 = vst.msk [vmem:[#allocation3] sm:$0x1] %vm53, %v78
    %v80 = vld [vmem:[#allocation4] sm:$0x1]
    %v81 = vsel %vm44, %v56, 0.0
    %v82 = vrot.slane %v81, 4
    %v83 = vadd.f32 %v81, %v82
    %v84 = vrot.slane %v83, 2
    %v85 = vadd.f32 %v83, %v84
    %v86 = vrot.slane %v85, 1
    %v87 = vadd.f32 %v85, %v86
    %v88 = vadd.f32 %v80, %v87
    %89 = vst.msk [vmem:[#allocation4] sm:$0x1] %vm53, %v88
    // Predicated region
    $region14: #{tpu_custom_call.1} parent=1 // pred_check
      %p90 = pneg %p12
    $region15: #{tpu_custom_call.1} parent=1 // pred_check_branch
      %92 = sbr.rel (%p90) target = $region17
    $region16: #{tpu_custom_call.1} parent=1 // pred_region
      %v93 = vld [vmem:[#allocation2] sm:$0x1]
      %v94 = vsel %vm53, %v93, 0.0
      %95 = vadd.xlane.f32.xlu0 %v94
      %v96 = vpop.xlane.xlu0 %95
      %v97 = vrot.slane %v96, 4
      %v98 = vadd.f32 %v96, %v97
      %v99 = vrot.slane %v98, 2
      %v100 = vadd.f32 %v98, %v99
      %v101 = vrot.slane %v100, 1
      %v102 = vadd.f32 %v100, %v101
      %s103 = vtos %v102
      %v104 = vrcp.pop 32.0
      %v105 = vmul.f32 32.0, %v104
      %v106 = vsub.f32 1.0, %v105
      %v107 = vmul.f32 %v104, %v106
      %v108 = vadd.f32 %v104, %v107
      %vm109 = vweird.f32 %v104
      %v110 = vsel %vm109, %v104, %v108
      %s111 = vtos %v110
      %s112 = smul.f32 %s103, %s111
      %v113 = vld [vmem:[#allocation4] sm:$0x1]
      %v114 = vmul.f32 %v113, 3.0
      %v115 = vmax.f32 %v114, 1.0
      %vm116 = vcmp.gt.f32.partialorder %v113, 0.0
      %v117 = vld [vmem:[#allocation3] sm:$0x1]
      %v118 = vrcp.pop %v115
      %v119 = vmul.f32 %v115, %v118
      %v120 = vsub.f32 1.0, %v119
      %v121 = vmul.f32 %v118, %v120
      %v122 = vadd.f32 %v118, %v121
      %vm123 = vweird.f32 %v115
      %vm124 = vweird.f32 %v118
      %vm125 = vmor %vm123, %vm124
      %v126 = vsel %vm125, %v118, %v122
      %v127 = vand.u32 2147483647, %v115
      %vm128 = vcmp.eq.f32.partialorder %v127, 8.507059e+37
      %v129 = vand.u32 %v115, 2147483648
      %v130 = vor.u32 1.1754944e-38, %v129
      %v131 = vsel %vm128, %v130, %v126
      %v132 = vmul.f32 %v117, %v131
      %v133 = vsel %vm116, %v132, 0.0
      %v134 = vsel %vm53, %v133, 0.0
      %135 = vadd.xlane.f32.xlu0 %v134
      %v136 = vpop.xlane.xlu0 %135
      %v137 = vrot.slane %v136, 4
      %v138 = vadd.f32 %v136, %v137
      %v139 = vrot.slane %v138, 2
      %v140 = vadd.f32 %v138, %v139
      %v141 = vrot.slane %v140, 1
      %v142 = vadd.f32 %v140, %v141
      %s143 = vtos %v142
      %v144 = vrcp.pop 4.0
      %v145 = vmul.f32 4.0, %v144
      %v146 = vsub.f32 1.0, %v145
      %v147 = vmul.f32 %v144, %v146
      %v148 = vadd.f32 %v144, %v147
      %vm149 = vweird.f32 %v144
      %v150 = vsel %vm149, %v144, %v148
      %s151 = vtos %v150
      %s152 = smul.f32 %s143, %s151
      %s153 = sadd.f32 %s112, %s152
      %s154 = scalar_lea.smem [#allocation5], 0
      %155 = sst [smem:[%s154]] %s153
    $region17: #{tpu_custom_call.1} parent=1 // pred_fallthru
      _
    // Predicated region
    $region18: #{tpu_custom_call.1} parent=1 // pred_check
      _
    $region19: #{tpu_custom_call.1} parent=1 // pred_check_branch
      %157 = sbr.rel (0) target = $region21
    $region20: #{tpu_custom_call.1} parent=1 // pred_region
      %159 = vsyncadd [#allocation6], 0
      %s161 = sshll.u32 %s2, 4
      %s162 = int_to_ptr.hbm [resolvable:$true] %s161
      %164 = dma.smem_to_hbm [#allocation5], 16, %s162, [#allocation6]
    $region21: #{tpu_custom_call.1} parent=1 // pred_fallthru
      _
    // Predicated region
    $region22: #{tpu_custom_call.1} parent=1 // pred_check
      _
    $region23: #{tpu_custom_call.1} parent=1 // pred_check_branch
      %166 = sbr.rel (0) target = $region25
    $region24: #{tpu_custom_call.1} parent=1 // pred_region
      %168 = dma.done [#allocation6], 16
    $region25: #{tpu_custom_call.1} parent=1 // pred_fallthru
      _
    %169 = sfence
    %170 = vsyncpa [#allocation6], 1

</llo_original>
